<compile_context>
chip_gen: v7x
topology: tpu7x:2x2x1
jax: 0.10.0
libtpu: 0.0.40
codegen_flags: <defaults>
</compile_context>

<pallas_src>
import jax
import jax.numpy as jnp
from jax.experimental import pallas as pl
from jax.experimental.pallas import tpu as pltpu


def _round_up(v, m):
    return ((v + m - 1) // m) * m


def _disentangler_kernel(x_ref, wp_ref, shift_ref, o_ref):
    # (tn, D_in_pad) bf16 @ (D_in_pad, tdo) bf16 -> f32 on the MXU.
    y = jnp.dot(x_ref[...], wp_ref[...], preferred_element_type=jnp.float32)
    y = y + shift_ref[...]                      # folded bias + BN shift, (1, tdo)
    o_ref[...] = jnp.maximum(y, 0.0).astype(o_ref.dtype)


def fold_disentangler_params(w, b, gamma, beta, running_mean, running_var,
                             eps=1e-5):
    """Fold Linear bias + BatchNorm (running stats) into kernel-ready (W', shift).

    Fold is done in f32; W' is cast to bf16 last (MXU-native operands), shift
    stays f32 for the post-matmul epilogue.  Both are padded to lane-dense
    (multiple-of-128) feature dims.  Cache the result across forward calls —
    it depends only on static inference weights.
    """
    d_out, d_in = w.shape
    scale = gamma * jax.lax.rsqrt(running_var + eps)      # (D_out,)
    shift = beta + (b - running_mean) * scale             # (D_out,)
    wp = w.T * scale[None, :]                             # (D_in, D_out), f32

    d_in_pad = _round_up(d_in, 128)
    d_out_pad = _round_up(d_out, 128)
    if (d_in_pad, d_out_pad) != (d_in, d_out):
        wp = jnp.zeros((d_in_pad, d_out_pad), wp.dtype).at[:d_in, :d_out].set(wp)
        shift = jnp.zeros((d_out_pad,), shift.dtype).at[:d_out].set(shift)
    wp = wp.astype(jnp.bfloat16)
    shift = shift.reshape(1, d_out_pad).astype(jnp.float32)
    return wp, shift, d_out


def att_distangler_forward_folded(x, wp_p, shift_p, d_out,
                                  tile_n=512, tile_dout=256):
    """x: (N, D_in) f32.  wp_p: (D_in_pad, D_out_pad) bf16.  shift_p: (1, D_out_pad) f32."""
    N, d_in = x.shape
    d_in_pad, d_out_pad = wp_p.shape

    # Row tile: multiple of 8 sublanes, large enough to amortize the ~0.35us
    # per-step overhead, but guarantee >=2 row-tile steps (megacore split on
    # v7x) whenever N allows it.
    n8 = _round_up(N, 8)
    tn = max(8, min(tile_n, n8))
    if n8 // tn < 2 and n8 >= 16:
        tn = _round_up(n8 // 2, 8)
    n_pad = _round_up(N, tn)

    # Output-column tile: 256 matches the v6e/v7x 256x256 MXU; fall back to 128
    # (always divides the 128-padded D_out) if 256 does not divide evenly.
    tdo = min(tile_dout, d_out_pad)
    if d_out_pad % tdo != 0:
        tdo = 128

    # Cast x to bf16 for the MXU; pad only if the shapes are not already aligned.
    x_bf = x.astype(jnp.bfloat16)
    if (n_pad, d_in_pad) != (N, d_in):
        x_bf = jnp.zeros((n_pad, d_in_pad), jnp.bfloat16).at[:N, :d_in].set(x_bf)

    out_itemsize = jnp.dtype(x.dtype).itemsize
    # Tile footprint (double-buffered inputs/outputs) + headroom.
    tile_bytes = (
        2 * tn * d_in_pad * 2          # x tile (bf16), 2 buffers
        + 2 * d_in_pad * tdo * 2       # W' tile (bf16), 2 buffers
        + 2 * 8 * tdo * 4              # shift tile (f32, padded to 8 sublanes)
        + 2 * tn * tdo * out_itemsize  # out tile, 2 buffers
    )
    vmem_limit = int(min(100 << 20, tile_bytes + (8 << 20)))

    out_p = pl.pallas_call(
        _disentangler_kernel,
        out_shape=jax.ShapeDtypeStruct((n_pad, d_out_pad), x.dtype),
        grid_spec=pltpu.PrefetchScalarGridSpec(
            num_scalar_prefetch=0,
            grid=(n_pad // tn, d_out_pad // tdo),
            in_specs=[
                pl.BlockSpec((tn, d_in_pad), lambda i, j: (i, 0)),   # x row tile
                pl.BlockSpec((d_in_pad, tdo), lambda i, j: (0, j)),  # W' col tile
                pl.BlockSpec((1, tdo), lambda i, j: (0, j)),         # shift tile
            ],
            out_specs=pl.BlockSpec((tn, tdo), lambda i, j: (i, j)),
        ),
        compiler_params=pltpu.CompilerParams(
            dimension_semantics=("parallel", "parallel"),
            vmem_limit_bytes=vmem_limit),
    )(x_bf, wp_p, shift_p)

    if (n_pad, d_out_pad) != (N, d_out):
        out_p = out_p[:N, :d_out]
    return out_p


def att_distangler_forward(x, w, b, gamma, beta, running_mean, running_var,
                           eps=1e-5, tile_n=512, tile_dout=256):
    """Convenience wrapper: fold params then run the kernel.  For repeated
    inference, call fold_disentangler_params once and reuse its outputs."""
    wp_p, shift_p, d_out = fold_disentangler_params(
        w, b, gamma, beta, running_mean, running_var, eps)
    return att_distangler_forward_folded(x, wp_p, shift_p, d_out,
                                         tile_n=tile_n, tile_dout=tile_dout)


def _reference(x, w, b, gamma, beta, running_mean, running_var, eps=1e-5):
    y = x @ w.T + b
    y = (y - running_mean) / jnp.sqrt(running_var + eps) * gamma + beta
    return jnp.maximum(y, 0.0)


if __name__ == "__main__":
    key = jax.random.PRNGKey(0)
    N, D = 8, 32   # batch=8, emd_dim=32 (Linear + BatchNorm1d on 2-D input)

    kx, kw, kb, kg, kbe, km, kv = jax.random.split(key, 7)
    x = jax.random.normal(kx, (N, D), dtype=jnp.float32)

    # PyTorch-style uniform(-1/sqrt(D), 1/sqrt(D)) init, deterministic.
    bound = 1.0 / jnp.sqrt(jnp.float32(D))
    w = jax.random.uniform(kw, (D, D), minval=-bound, maxval=bound,
                           dtype=jnp.float32)
    b = jax.random.uniform(kb, (D,), minval=-bound, maxval=bound,
                           dtype=jnp.float32)
    gamma = 1.0 + 0.1 * jax.random.normal(kg, (D,), dtype=jnp.float32)
    beta = 0.1 * jax.random.normal(kbe, (D,), dtype=jnp.float32)
    running_mean = 0.05 * jax.random.normal(km, (D,), dtype=jnp.float32)
    running_var = 1.0 + 0.1 * jax.random.uniform(kv, (D,), dtype=jnp.float32)

    # Fold once (cacheable), run kernel.
    wp_p, shift_p, d_out = fold_disentangler_params(
        w, b, gamma, beta, running_mean, running_var)
    out = att_distangler_forward_folded(x, wp_p, shift_p, d_out)
    out = jax.block_until_ready(out)

    ref = _reference(x, w, b, gamma, beta, running_mean, running_var)
    assert out.shape == (N, D)
    # bf16 MXU operands -> loosen tolerance vs the pure-f32 reference.
    assert jnp.allclose(out, ref, atol=3e-2, rtol=3e-2), (
        f"max abs err {jnp.max(jnp.abs(out - ref))}")

    print("KERNEL_OK")
</pallas_src>

<mosaic_0001>
module attributes {stable_mosaic.version = 11 : i64} {
  func.func @_disentangler_kernel(%arg0: i32, %arg1: i32, %arg2: memref<8x128xbf16, #tpu.memory_space<vmem>>, %arg3: memref<128x128xbf16, #tpu.memory_space<vmem>>, %arg4: memref<1x128xf32, #tpu.memory_space<vmem>>, %arg5: memref<8x128xf32, #tpu.memory_space<vmem>>) attributes {dimension_semantics = [#tpu.dimension_semantics<parallel>, #tpu.dimension_semantics<parallel>], iteration_bounds = array<i64: 1, 1>, scalar_prefetch = 0 : i64, scratch_operands = 0 : i64, tpu.core_type = #tpu.core_type<tc>, window_params = [{transform_indices = @transform_0, window_bounds = array<i64: 8, 128>}, {transform_indices = @transform_1, window_bounds = array<i64: 128, 128>}, {transform_indices = @transform_2, window_bounds = array<i64: 1, 128>}, {transform_indices = @transform_3, window_bounds = array<i64: 8, 128>}]} {
    %c0 = arith.constant 0 : index
    %c0_0 = arith.constant 0 : index
    %0 = vector.load %arg2[%c0, %c0_0] : memref<8x128xbf16, #tpu.memory_space<vmem>>, vector<8x128xbf16>
    %c0_1 = arith.constant 0 : index
    %c0_2 = arith.constant 0 : index
    %1 = vector.load %arg3[%c0_1, %c0_2] : memref<128x128xbf16, #tpu.memory_space<vmem>>, vector<128x128xbf16>
    %cst = arith.constant dense<0.000000e+00> : vector<8x128xf32>
    %2 = tpu.matmul %0, %1, %cst {dimension_numbers = #tpu.dot_dimension_numbers<[1], [0], [0], [1], [0, 0, 1, 1], [], []>} : vector<8x128xbf16>, vector<128x128xbf16>, vector<8x128xf32> -> vector<8x128xf32>
    %c0_3 = arith.constant 0 : index
    %c0_4 = arith.constant 0 : index
    %3 = vector.load %arg4[%c0_3, %c0_4] : memref<1x128xf32, #tpu.memory_space<vmem>>, vector<1x128xf32>
    %4 = vector.broadcast %3 : vector<1x128xf32> to vector<8x128xf32>
    %5 = arith.addf %2, %4 : vector<8x128xf32>
    %cst_5 = arith.constant 0.000000e+00 : f32
    %6 = vector.broadcast %cst_5 : f32 to vector<8x128xf32>
    %7 = arith.maximumf %5, %6 : vector<8x128xf32>
    %c0_6 = arith.constant 0 : index
    %c0_7 = arith.constant 0 : index
    %8 = vector.load %arg5[%c0_6, %c0_7] : memref<8x128xf32, #tpu.memory_space<vmem>>, vector<8x128xf32>
    tpu.vector_store %arg5[%c0_6, %c0_7], %7 {strides = array<i32>} : memref<8x128xf32, #tpu.memory_space<vmem>>, vector<8x128xf32>,
    return
  }
  func.func @transform_0(%arg0: i32, %arg1: i32) -> (i32, i32) {
    %c0_i32 = arith.constant 0 : i32
    %c0_i32_0 = arith.constant 0 : i32
    return %arg0, %c0_i32 : i32, i32
  }
  func.func @transform_1(%arg0: i32, %arg1: i32) -> (i32, i32) {
    %c0_i32 = arith.constant 0 : i32
    %c0_i32_0 = arith.constant 0 : i32
    return %c0_i32, %arg1 : i32, i32
  }
  func.func @transform_2(%arg0: i32, %arg1: i32) -> (i32, i32) {
    %c0_i32 = arith.constant 0 : i32
    %c0_i32_0 = arith.constant 0 : i32
    return %c0_i32, %arg1 : i32, i32
  }
  func.func @transform_3(%arg0: i32, %arg1: i32) -> (i32, i32) {
    %c0_i32 = arith.constant 0 : i32
    return %arg0, %arg1 : i32, i32
  }
}

</mosaic_0001>

<llo_original>
// kernel: tpu_custom_call.1
$region0: #{tpu_custom_call.1}
  #allocation0 [shape = 'u32[]', space=smem, size = 0x4, offset = 0x4, fixed_abs, tag = 'smem constant byte address 0x4 - core index']
  #allocation1 [shape = 'u32[144,128]{1,0:T(1,128)}', space=vmem, size = 0x12000, scoped, tag = 'internal scratch']
  %s0 = inlined_call_operand.hbm [shape: bf16[8,128], index: 0, kind: input, shape index: {}]
  %s1 = inlined_call_operand.hbm [shape: bf16[128,128], index: 1, kind: input, shape index: {}]
  %s2 = inlined_call_operand.vmem [shape: f32[1,128], index: 2, kind: input, shape index: {}]
  %s3 = inlined_call_operand.hbm [shape: f32[8,128], index: 3, kind: output, shape index: {}]
  %s4 = sld [smem:[#allocation0]]
  $region30: #{tpu_custom_call.1} parent=0
    _
  %s6 = ssub.s32 1, %s4
  %s7 = scalar_select 0, %s6, %s4
  $region1: #{tpu_custom_call.1} parent=0
    #allocation2 [shape = 'u8[2048]{0}', space=vmem, size = 0x800, scoped, tag = 'input window, operand 0, single buffered']
    #allocation3 [shape = 's32[1]{0}', space=sflag, size = 0x4, scoped, tag = 'scoped memory for tpu_custom_call.1']
    #allocation4 [shape = 's32[1]{0}', space=sflag, size = 0x4, scoped, tag = 'scoped memory for tpu_custom_call.1']
    #allocation5 [shape = 'u8[32768]{0}', space=vmem, size = 0x8000, scoped, tag = 'input window, operand 1, single buffered']
    #allocation6 [shape = 's32[1]{0}', space=sflag, size = 0x4, scoped, tag = 'scoped memory for tpu_custom_call.1']
    #allocation7 [shape = 'u8[4096]{0}', space=vmem, size = 0x1000, scoped, tag = 'output window, operand 0, single buffered']
    %8 = vsyncpa [#allocation3], 0
    %9 = vsyncpa [#allocation6], 0
    %10 = vsyncpa [#allocation4], 0
    // Predicated region
    $region2: #{tpu_custom_call.1} parent=1 // pred_check
      _
    $region3: #{tpu_custom_call.1} parent=1 // pred_check_branch
      %12 = sbr.rel (0) target = $region5
    $region4: #{tpu_custom_call.1} parent=1 // pred_region
      %s14 = ssub.s32 64, 64
      %15 = vsyncadd [#allocation3], %s14
      %s17 = sshll.u32 [#allocation2], 4
      %s18 = int_to_ptr.vmem [resolvable:$true] %s17
      %20 = dma.hbm_to_vmem [thread:$0]  %s0, 64, %s18, [#allocation3]
    $region5: #{tpu_custom_call.1} parent=1 // pred_fallthru
      _
    // Predicated region
    $region6: #{tpu_custom_call.1} parent=1 // pred_check
      _
    $region7: #{tpu_custom_call.1} parent=1 // pred_check_branch
      %22 = sbr.rel (0) target = $region9
    $region8: #{tpu_custom_call.1} parent=1 // pred_region
      %s24 = ssub.s32 1024, 1024
      %25 = vsyncadd [#allocation6], %s24
      %s26 = sshll.u32 [#allocation5], 4
      %s27 = int_to_ptr.vmem [resolvable:$true] %s26
      %32 = dma.hbm_to_vmem [thread:$0]  %s1, 1024, %s27, [#allocation6], 64, 64, 4
    $region9: #{tpu_custom_call.1} parent=1 // pred_fallthru
      _
    // Predicated region
    $region10: #{tpu_custom_call.1} parent=1 // pred_check
      _
    $region11: #{tpu_custom_call.1} parent=1 // pred_check_branch
      %34 = sbr.rel (0) target = $region13
    $region12: #{tpu_custom_call.1} parent=1 // pred_region
      _
    $region13: #{tpu_custom_call.1} parent=1 // pred_fallthru
      _
    // Predicated region
    $region14: #{tpu_custom_call.1} parent=1 // pred_check
      _
    $region15: #{tpu_custom_call.1} parent=1 // pred_check_branch
      %36 = sbr.rel (0) target = $region17
    $region16: #{tpu_custom_call.1} parent=1 // pred_region
      %37 = dma.done [#allocation3], 64
    $region17: #{tpu_custom_call.1} parent=1 // pred_fallthru
      _
    // Predicated region
    $region18: #{tpu_custom_call.1} parent=1 // pred_check
      _
    $region19: #{tpu_custom_call.1} parent=1 // pred_check_branch
      %39 = sbr.rel (0) target = $region21
    $region20: #{tpu_custom_call.1} parent=1 // pred_region
      %40 = dma.done [#allocation6], 1024
    $region21: #{tpu_custom_call.1} parent=1 // pred_fallthru
      _
    %v42 = vld [vmem:[#allocation2] sm:$0xf]
    %v43 = vld [vmem:[#allocation5] sm:$0xf]
    %v44 = vld [vmem:[#allocation5 + $0x4] sm:$0xf]
    %v45 = vld [vmem:[#allocation5 + $0x8] sm:$0xf]
    %v46 = vld [vmem:[#allocation5 + $0xc] sm:$0xf]
    %v47 = vld [vmem:[#allocation5 + $0x10] sm:$0xf]
    %v48 = vld [vmem:[#allocation5 + $0x14] sm:$0xf]
    %v49 = vld [vmem:[#allocation5 + $0x18] sm:$0xf]
    %v50 = vld [vmem:[#allocation5 + $0x1c] sm:$0xf]
    %v51 = vld [vmem:[#allocation5 + $0x20] sm:$0xf]
    %v52 = vld [vmem:[#allocation5 + $0x24] sm:$0xf]
    %v53 = vld [vmem:[#allocation5 + $0x28] sm:$0xf]
    %v54 = vld [vmem:[#allocation5 + $0x2c] sm:$0xf]
    %v55 = vld [vmem:[#allocation5 + $0x30] sm:$0xf]
    %v56 = vld [vmem:[#allocation5 + $0x34] sm:$0xf]
    %v57 = vld [vmem:[#allocation5 + $0x38] sm:$0xf]
    %v58 = vld [vmem:[#allocation5 + $0x3c] sm:$0xf]
    %v59 = vld [vmem:[%s2] sm:$0x1]
    %v61 = vlaneseq
    %v62 = vshrl.u32 %v61, 7
    %v63 = vsub.s32 0, %v62
    %v64 = vrot.slane %v59, %v63
    %v82 = vunpack.c.l.b16 %v43
    %v83 = vunpack.c.l.b16 %v44
    %v84 = vunpack.c.l.b16 %v45
    %v85 = vunpack.c.l.b16 %v46
    %v86 = vunpack.c.l.b16 %v47
    %v87 = vunpack.c.l.b16 %v48
    %v88 = vunpack.c.l.b16 %v49
    %v89 = vunpack.c.l.b16 %v50
    %v90 = vunpack.c.l.b16 %v51
    %v91 = vunpack.c.l.b16 %v52
    %v92 = vunpack.c.l.b16 %v53
    %v93 = vunpack.c.l.b16 %v54
    %v94 = vunpack.c.l.b16 %v55
    %v95 = vunpack.c.l.b16 %v56
    %v96 = vunpack.c.l.b16 %v57
    %v97 = vunpack.c.l.b16 %v58
    %v98 = vpack.c.b16 %v83, %v82
    %v99 = vpack.c.b16 %v85, %v84
    %v100 = vpack.c.b16 %v87, %v86
    %v101 = vpack.c.b16 %v89, %v88
    %v102 = vpack.c.b16 %v91, %v90
    %v103 = vpack.c.b16 %v93, %v92
    %v104 = vpack.c.b16 %v95, %v94
    %v105 = vpack.c.b16 %v97, %v96
    %114 = vmatprep.subr.bf16.mxu0 0
    %115 = vmatpush1.bf16.msra.mxu0 %v98
    %116 = vmatprep.subr.bf16.mxu0 0
    %117 = vmatpush1.bf16.msra.mxu0 %v99
    %118 = vmatprep.subr.bf16.mxu0 0
    %119 = vmatpush1.bf16.msra.mxu0 %v100
    %120 = vmatprep.subr.bf16.mxu0 0
    %121 = vmatpush1.bf16.msra.mxu0 %v101
    %122 = vmatprep.subr.bf16.mxu0 0
    %123 = vmatpush1.bf16.msra.mxu0 %v102
    %124 = vmatprep.subr.bf16.mxu0 0
    %125 = vmatpush1.bf16.msra.mxu0 %v103
    %126 = vmatprep.subr.bf16.mxu0 0
    %127 = vmatpush1.bf16.msra.mxu0 %v104
    %128 = vmatprep.subr.bf16.mxu0 0
    %129 = vmatpush1.bf16.msra.mxu0 %v105
    %130 = vmatprep.subr.bf16.mxu0 0
    %131 = vmatpush1.bf16.msra.mxu0 0
    %132 = vmatprep.subr.bf16.mxu0 0
    %133 = vmatpush1.bf16.msra.mxu0 0
    %134 = vmatprep.subr.bf16.mxu0 0
    %135 = vmatpush1.bf16.msra.mxu0 0
    %136 = vmatprep.subr.bf16.mxu0 0
    %137 = vmatpush1.bf16.msra.mxu0 0
    %138 = vmatprep.subr.bf16.mxu0 0
    %139 = vmatpush1.bf16.msra.mxu0 0
    %140 = vmatprep.subr.bf16.mxu0 0
    %141 = vmatpush1.bf16.msra.mxu0 0
    %142 = vmatprep.subr.bf16.mxu0 0
    %143 = vmatpush1.bf16.msra.mxu0 0
    %144 = vmatprep.subr.bf16.mxu0 0
    %145 = vmatpush1.bf16.msra.mxu0 0
    %146 = vmatprep.mubr.bf16.mxu0 0
    %147 = vmatmul.mubr.bf16.gmra.mrb[0].mxu0 %v42
    %v148 = vpop.f32.mrb[0].mxu0
    %v149 = vadd.f32 %v64, %v148
    %v150 = vpop.f32.mrb[0].mxu0
    %v151 = vpop.f32.mrb[0].mxu0
    %v152 = vpop.f32.mrb[0].mxu0
    %153 = vdwg.mxu0
    %v154 = vmax.f32 %v149, 0.0
    %155 = vst [vmem:[#allocation7] sm:$0xff] %v154
    // Predicated region
    $region22: #{tpu_custom_call.1} parent=1 // pred_check
      _
    $region23: #{tpu_custom_call.1} parent=1 // pred_check_branch
      %157 = sbr.rel (0) target = $region25
    $region24: #{tpu_custom_call.1} parent=1 // pred_region
      %s159 = ssub.s32 128, 128
      %160 = vsyncadd [#allocation4], %s159
      %s162 = sshll.u32 [#allocation7], 4
      %s163 = int_to_ptr.vmem [resolvable:$true] %s162
      %165 = dma.vmem_to_hbm [thread:$0]  %s163, 128, %s3, [#allocation4]
    $region25: #{tpu_custom_call.1} parent=1 // pred_fallthru
      _
    // Predicated region
    $region26: #{tpu_custom_call.1} parent=1 // pred_check
      _
    $region27: #{tpu_custom_call.1} parent=1 // pred_check_branch
      %167 = sbr.rel (0) target = $region29
    $region28: #{tpu_custom_call.1} parent=1 // pred_region
      %168 = dma.done [#allocation4], 128
    $region29: #{tpu_custom_call.1} parent=1 // pred_fallthru
      _
    %169 = vsyncpa [#allocation3], 1
    %170 = vsyncpa [#allocation6], 1
    %171 = vsyncpa [#allocation4], 1

</llo_original>
